<compile_context>
chip_gen: v7x
topology: tpu7x:2x2x1
jax: 0.10.0
libtpu: 0.0.40
codegen_flags: <defaults>
</compile_context>

<pallas_src>
import functools

import jax
import jax.numpy as jnp
from jax import lax
from jax.experimental import pallas as pl
from jax.experimental.pallas import tpu as pltpu

THRESHOLD = 2      # module __init__ arg: compared against the class index (quirk of the spec)
GAMMA = 2          # module default; keep as a Python int (integer_pow, not exp/log)

_INV_LN2 = 1.4426950408889634  # 1 / ln(2)


def _round_up(x, m):
    return ((x + m - 1) // m) * m


def _device_kind():
    try:
        return jax.devices()[0].device_kind.lower()
    except Exception:
        return ""


def _vmem_budget_bytes():
    kind = _device_kind()
    if ("v6" in kind) or ("v7" in kind) or ("tpu7" in kind) or ("7x" in kind):
        return 22 << 20     # v6e / v7x: 32 MiB default scoped VMEM -> ~10 MiB headroom left
    return 10 << 20         # v5e (16 MiB default scoped VMEM) and older gens: conservative


def _default_num_partitions():
    kind = _device_kind()
    # v7x has 2 TensorCores per chip sharing HBM: split the batch reduction across them.
    return 2 if (("v7" in kind) or ("tpu7" in kind) or ("7x" in kind)) else 1


def focal_loss_kernel(logits_ref, target_ref, out_ref, *,
                      n_true, tile_n, blocks_per_part):
    p = pl.program_id(0)          # core / partition axis ("parallel")
    i = pl.program_id(1)          # row-tile axis within the partition ("arbitrary")

    @pl.when(i == 0)
    def _init():
        out_ref[...] = jnp.zeros_like(out_ref)

    x = logits_ref[...].astype(jnp.float32)         # (tile_n, C) f32 compute
    tgt = target_ref[...]                           # (tile_n, 1) int32
    tn, c = x.shape

    # Nominal (unclamped) global row index of each local row.  Rows >= n_true are either
    # OOB garbage of the partial trailing block or a clamped duplicate block.
    row0 = (p * blocks_per_part + i) * tile_n
    row = lax.broadcasted_iota(jnp.int32, (tn, 1), 0) + row0
    valid = row < n_true                            # (tile_n, 1) bool

    # Select-mask BEFORE exp: garbage must never reach exp/log (Inf/NaN would poison sums).
    x = jnp.where(valid, x, 0.0)
    tgt = jnp.where(valid, tgt, 0)

    # Softmax: only the gathered numerator and the denominator (no probs temporary).
    m = jnp.max(x, axis=1, keepdims=True)
    e = jnp.exp(x - m)                              # (tile_n, C)
    denom = jnp.sum(e, axis=1, keepdims=True)       # (tile_n, 1)
    lane = lax.broadcasted_iota(jnp.int32, (tn, c), 1)
    numer = jnp.sum(jnp.where(lane == tgt, e, 0.0), axis=1, keepdims=True)
    pt = numer / denom                              # divide only the (tile_n, 1) column

    # Gate on the *class index* (faithful to the PyTorch code); Pt**gate -> Pt or 1.
    gate = jnp.where(tgt > THRESHOLD, 1.0, 0.0)
    log2pt = jnp.log(pt) * _INV_LN2
    # -(1-Pt)^gamma*log2(Pt) + -log2((Pt^gate)^2) == -(1-Pt)^gamma*log2(Pt) - 2*gate*log2(Pt)
    loss = -((1.0 - pt) ** GAMMA) * log2pt - 2.0 * gate * log2pt
    loss = jnp.where(valid, loss, 0.0)

    # Per-partition partial sum broadcast into this core's resident (1, 8, 128) block.
    out_ref[...] += jnp.sum(loss)


def focal_loss(logits, target, *, tile_n=None, num_partitions=None):
    n, c = logits.shape
    n_true = n
    in_item = jnp.dtype(logits.dtype).itemsize
    sub = max(8, 32 // max(1, in_item))   # row quantum: f32 -> 8, bf16 -> 16, int8/fp8 -> 32

    tgt2d = target.reshape(-1).astype(jnp.int32).reshape(n, 1)
    if n < sub:                           # tiny-batch corner case only (negligible pad cost)
        logits = jnp.pad(logits, ((0, sub - n), (0, 0)))
        tgt2d = jnp.pad(tgt2d, ((0, sub - n), (0, 0)))
        n = sub

    if num_partitions is None:
        num_partitions = _default_num_partitions()
    num_partitions = max(1, int(num_partitions))

    # Byte-based tile sizing against the per-generation scoped-VMEM budget.
    lane_c = _round_up(c, 128)            # narrow C is lane-padded to 128 in VMEM
    # Double-buffered (logits + target) input blocks + ~6 lane-padded f32 temporaries.
    per_row = 2 * (lane_c * in_item + 128 * 4) + 6 * lane_c * 4
    budget = _vmem_budget_bytes()
    vmem_limit = None
    if sub * per_row > budget:
        # Huge class counts: even the minimal tile overflows the default scoped VMEM;
        # raise the limit explicitly but stay under v7x's 64 MiB *physical* VMEM.
        budget = min(sub * per_row + (2 << 20), 56 << 20)
        vmem_limit = budget
        # TODO(synk): if C is so large that even this overflows, tile the class axis with an
        # online softmax (running max / running denom / gathered numer).

    if tile_n is None:
        tile_n = budget // per_row
    tile_n = max(sub, (int(tile_n) // sub) * sub)
    tile_n = min(tile_n, (n // sub) * sub)          # never make a block larger than the array

    num_blocks = pl.cdiv(n, tile_n)
    blocks_per_part = pl.cdiv(num_blocks, num_partitions)
    grid = (num_partitions, blocks_per_part)

    def _row_block(p, i):
        # Clamp so a partition's spare trailing steps re-read the last block (fully masked
        # in-kernel via the nominal row index) instead of issuing an out-of-range DMA.
        return jnp.minimum(p * blocks_per_part + i, num_blocks - 1)

    kernel = functools.partial(focal_loss_kernel, n_true=n_true, tile_n=tile_n,
                               blocks_per_part=blocks_per_part)
    out = pl.pallas_call(
        kernel,
        out_shape=jax.ShapeDtypeStruct((num_partitions, 8, 128), jnp.float32),
        grid=grid,
        in_specs=[
            pl.BlockSpec((tile_n, c), lambda p, i: (_row_block(p, i), 0)),
            pl.BlockSpec((tile_n, 1), lambda p, i: (_row_block(p, i), 0)),
        ],
        # One resident accumulator block per partition: no cross-core race under "parallel".
        out_specs=pl.BlockSpec((1, 8, 128), lambda p, i: (p, 0, 0)),
        compiler_params=pltpu.CompilerParams(
            dimension_semantics=("parallel", "arbitrary"),
            vmem_limit_bytes=vmem_limit),
    )(logits, tgt2d)

    # Each partition's block holds its partial sum replicated; combine + mean outside.
    return jnp.sum(out[:, 0, 0]) / n_true


def focal_loss_ref(logits, target):
    probs = jax.nn.softmax(logits.astype(jnp.float32), axis=1)
    pt = probs[jnp.arange(logits.shape[0]), target]
    gate = jnp.where(target > THRESHOLD, 1.0, 0.0)
    log2pt = jnp.log2(pt)
    loss = -((1.0 - pt) ** GAMMA) * log2pt - 2.0 * gate * log2pt
    return jnp.mean(loss)


if __name__ == "__main__":
    key = jax.random.PRNGKey(0)
    k_logits, k_tgt = jax.random.split(key)

    N, C = 20, 16                         # small (batch, classes); N not a tile multiple on purpose
    logits = jax.random.normal(k_logits, (N, C), dtype=jnp.float32)
    target = jax.random.randint(k_tgt, (N,), 0, C, dtype=jnp.int32)

    ref = jax.block_until_ready(focal_loss_ref(logits, target))

    # Multi-tile path (unpadded array, trailing partial block masked in-kernel).
    loss_tiled = jax.block_until_ready(focal_loss(logits, target, tile_n=8))
    assert jnp.allclose(loss_tiled, ref, rtol=1e-5, atol=1e-5), (loss_tiled, ref)

    # Forced two-partition (v7x-style dual-core) path: exercises per-core accumulators and
    # the clamped duplicate block that must be fully masked.
    loss_2core = jax.block_until_ready(focal_loss(logits, target, tile_n=8, num_partitions=2))
    assert jnp.allclose(loss_2core, ref, rtol=1e-5, atol=1e-5), (loss_2core, ref)

    # Auto-tile / auto-partition path.
    loss_auto = jax.block_until_ready(focal_loss(logits, target))
    assert jnp.allclose(loss_auto, ref, rtol=1e-5, atol=1e-5), (loss_auto, ref)

    # bf16 logits (half the HBM traffic); kernel upcasts per-tile to f32.
    loss_bf16 = jax.block_until_ready(focal_loss(logits.astype(jnp.bfloat16), target))
    assert jnp.allclose(loss_bf16, ref, rtol=5e-2, atol=5e-2), (loss_bf16, ref)

    print("KERNEL_OK")
</pallas_src>

<mosaic_0001>
module attributes {stable_mosaic.version = 11 : i64} {
  func.func @focal_loss_kernel(%arg0: i32, %arg1: i32, %arg2: memref<8x16xf32, #tpu.memory_space<vmem>>, %arg3: memref<8x1xi32, #tpu.memory_space<vmem>>, %arg4: memref<1x8x128xf32, #tpu.memory_space<vmem>>) attributes {dimension_semantics = [#tpu.dimension_semantics<parallel>, #tpu.dimension_semantics<arbitrary>], iteration_bounds = array<i64: 1, 3>, scalar_prefetch = 0 : i64, scratch_operands = 0 : i64, tpu.core_type = #tpu.core_type<tc>, window_params = [{transform_indices = @transform_0, window_bounds = array<i64: 8, 16>}, {transform_indices = @transform_1, window_bounds = array<i64: 8, 1>}, {transform_indices = @transform_2, window_bounds = array<i64: 1, 8, 128>}]} {
    %c0_i32 = arith.constant 0 : i32
    %0 = arith.cmpi eq, %arg1, %c0_i32 : i32
    %1 = arith.extui %0 : i1 to i32
    %c0_i32_0 = arith.constant 0 : i32
    %2 = arith.cmpi ne, %1, %c0_i32_0 : i32
    scf.if %2 {
      %cst_23 = arith.constant 0.000000e+00 : f32
      %62 = vector.broadcast %cst_23 : f32 to vector<1x8x128xf32>
      %c0_24 = arith.constant 0 : index
      %c0_25 = arith.constant 0 : index
      %c0_26 = arith.constant 0 : index
      %63 = vector.load %arg4[%c0_24, %c0_25, %c0_26] : memref<1x8x128xf32, #tpu.memory_space<vmem>>, vector<1x8x128xf32>
      tpu.vector_store %arg4[%c0_24, %c0_25, %c0_26], %62 {strides = array<i32>} : memref<1x8x128xf32, #tpu.memory_space<vmem>>, vector<1x8x128xf32>,
    } else {
    }
    %c0 = arith.constant 0 : index
    %c0_1 = arith.constant 0 : index
    %3 = vector.load %arg2[%c0, %c0_1] : memref<8x16xf32, #tpu.memory_space<vmem>>, vector<8x16xf32>
    %c0_2 = arith.constant 0 : index
    %c0_3 = arith.constant 0 : index
    %4 = vector.load %arg3[%c0_2, %c0_3] : memref<8x1xi32, #tpu.memory_space<vmem>>, vector<8x1xi32>
    %c3_i32 = arith.constant 3 : i32
    %5 = arith.muli %arg0, %c3_i32 : i32
    %6 = arith.addi %5, %arg1 : i32
    %c8_i32 = arith.constant 8 : i32
    %7 = arith.muli %6, %c8_i32 : i32
    %8 = tpu.iota {dimensions = array<i32: 0>} : vector<8x1xi32>
    %9 = vector.broadcast %7 : i32 to vector<8x1xi32>
    %10 = arith.addi %8, %9 : vector<8x1xi32>
    %c20_i32 = arith.constant 20 : i32
    %11 = vector.broadcast %c20_i32 : i32 to vector<8x1xi32>
    %12 = arith.cmpi slt, %10, %11 : vector<8x1xi32>
    %cst = arith.constant 0.000000e+00 : f32
    %13 = vector.shape_cast %12 : vector<8x1xi1> to vector<8x1xi1>
    %14 = vector.broadcast %13 : vector<8x1xi1> to vector<8x16xi1>
    %15 = vector.broadcast %cst : f32 to vector<8x16xf32>
    %16 = arith.select %14, %3, %15 : vector<8x16xi1>, vector<8x16xf32>
    %c0_i32_4 = arith.constant 0 : i32
    %17 = vector.broadcast %c0_i32_4 : i32 to vector<8x1xi32>
    %18 = arith.select %12, %4, %17 : vector<8x1xi1>, vector<8x1xi32>
    %cst_5 = arith.constant dense<0xFF800000> : vector<8xf32>
    %19 = vector.multi_reduction <maximumf>, %16, %cst_5 [1] : vector<8x16xf32> to vector<8xf32>
    %20 = vector.shape_cast %19 : vector<8xf32> to vector<8x1xf32>
    %21 = vector.broadcast %20 : vector<8x1xf32> to vector<8x16xf32>
    %22 = arith.subf %16, %21 : vector<8x16xf32>
    %23 = math.exp %22 : vector<8x16xf32>
    %cst_6 = arith.constant dense<0.000000e+00> : vector<8xf32>
    %24 = vector.multi_reduction <add>, %23, %cst_6 [1] : vector<8x16xf32> to vector<8xf32>
    %25 = vector.shape_cast %24 : vector<8xf32> to vector<8x1xf32>
    %26 = tpu.iota {dimensions = array<i32: 1>} : vector<8x16xi32>
    %27 = vector.broadcast %18 : vector<8x1xi32> to vector<8x16xi32>
    %28 = arith.cmpi eq, %26, %27 : vector<8x16xi32>
    %cst_7 = arith.constant 0.000000e+00 : f32
    %29 = vector.broadcast %cst_7 : f32 to vector<8x16xf32>
    %30 = arith.select %28, %23, %29 : vector<8x16xi1>, vector<8x16xf32>
    %cst_8 = arith.constant dense<0.000000e+00> : vector<8xf32>
    %31 = vector.multi_reduction <add>, %30, %cst_8 [1] : vector<8x16xf32> to vector<8xf32>
    %32 = vector.shape_cast %31 : vector<8xf32> to vector<8x1xf32>
    %33 = arith.divf %32, %25 : vector<8x1xf32>
    %c2_i32 = arith.constant 2 : i32
    %34 = vector.broadcast %c2_i32 : i32 to vector<8x1xi32>
    %35 = arith.cmpi sgt, %18, %34 : vector<8x1xi32>
    %cst_9 = arith.constant 1.000000e+00 : f32
    %cst_10 = arith.constant 0.000000e+00 : f32
    %36 = vector.broadcast %cst_9 : f32 to vector<8x1xf32>
    %37 = vector.broadcast %cst_10 : f32 to vector<8x1xf32>
    %38 = arith.select %35, %36, %37 : vector<8x1xi1>, vector<8x1xf32>
    %39 = math.log %33 : vector<8x1xf32>
    %cst_11 = arith.constant 1.44269502 : f32
    %40 = vector.broadcast %cst_11 : f32 to vector<8x1xf32>
    %41 = arith.mulf %39, %40 : vector<8x1xf32>
    %cst_12 = arith.constant 1.000000e+00 : f32
    %42 = vector.broadcast %cst_12 : f32 to vector<8x1xf32>
    %43 = arith.subf %42, %33 : vector<8x1xf32>
    %44 = arith.mulf %43, %43 : vector<8x1xf32>
    %cst_13 = arith.constant 0.000000e+00 : f32
    %45 = vector.broadcast %cst_13 : f32 to vector<8x1xf32>
    %46 = arith.subf %45, %44 : vector<8x1xf32>
    %47 = arith.mulf %46, %41 : vector<8x1xf32>
    %cst_14 = arith.constant 2.000000e+00 : f32
    %48 = vector.broadcast %cst_14 : f32 to vector<8x1xf32>
    %49 = arith.mulf %48, %38 : vector<8x1xf32>
    %50 = arith.mulf %49, %41 : vector<8x1xf32>
    %51 = arith.subf %47, %50 : vector<8x1xf32>
    %cst_15 = arith.constant 0.000000e+00 : f32
    %52 = vector.broadcast %cst_15 : f32 to vector<8x1xf32>
    %53 = arith.select %12, %51, %52 : vector<8x1xi1>, vector<8x1xf32>
    %c0_16 = arith.constant 0 : index
    %c0_17 = arith.constant 0 : index
    %c0_18 = arith.constant 0 : index
    %54 = vector.load %arg4[%c0_16, %c0_17, %c0_18] : memref<1x8x128xf32, #tpu.memory_space<vmem>>, vector<1x8x128xf32>
    %55 = vector.shape_cast %53 : vector<8x1xf32> to vector<1x8x1xf32>
    %cst_19 = arith.constant dense<0.000000e+00> : vector<1xf32>
    %56 = vector.multi_reduction <add>, %55, %cst_19 [1, 2] : vector<1x8x1xf32> to vector<1xf32>
    %57 = vector.shape_cast %56 : vector<1xf32> to vector<1x1x1xf32>
    %58 = vector.extract %57[0, 0, 0] : f32 from vector<1x1x1xf32>
    %59 = vector.broadcast %58 : f32 to vector<1x8x128xf32>
    %60 = arith.addf %54, %59 : vector<1x8x128xf32>
    %c0_20 = arith.constant 0 : index
    %c0_21 = arith.constant 0 : index
    %c0_22 = arith.constant 0 : index
    %61 = vector.load %arg4[%c0_20, %c0_21, %c0_22] : memref<1x8x128xf32, #tpu.memory_space<vmem>>, vector<1x8x128xf32>
    tpu.vector_store %arg4[%c0_20, %c0_21, %c0_22], %60 {strides = array<i32>} : memref<1x8x128xf32, #tpu.memory_space<vmem>>, vector<1x8x128xf32>,
    return
  }
  func.func @transform_0(%arg0: i32, %arg1: i32) -> (i32, i32) {
    %c3_i32 = arith.constant 3 : i32
    %0 = arith.muli %arg0, %c3_i32 : i32
    %1 = arith.addi %0, %arg1 : i32
    %c2_i32 = arith.constant 2 : i32
    %2 = arith.minsi %1, %c2_i32 : i32
    %c0_i32 = arith.constant 0 : i32
    %c0_i32_0 = arith.constant 0 : i32
    return %2, %c0_i32 : i32, i32
  }
  func.func @transform_1(%arg0: i32, %arg1: i32) -> (i32, i32) {
    %c3_i32 = arith.constant 3 : i32
    %0 = arith.muli %arg0, %c3_i32 : i32
    %1 = arith.addi %0, %arg1 : i32
    %c2_i32 = arith.constant 2 : i32
    %2 = arith.minsi %1, %c2_i32 : i32
    %c0_i32 = arith.constant 0 : i32
    %c0_i32_0 = arith.constant 0 : i32
    return %2, %c0_i32 : i32, i32
  }
  func.func @transform_2(%arg0: i32, %arg1: i32) -> (i32, i32, i32) {
    %c0_i32 = arith.constant 0 : i32
    %c0_i32_0 = arith.constant 0 : i32
    %c0_i32_1 = arith.constant 0 : i32
    return %arg0, %c0_i32, %c0_i32_0 : i32, i32, i32
  }
}

</mosaic_0001>

<llo_original>
// kernel: tpu_custom_call.1
$region0: #{tpu_custom_call.1}
  #allocation0 [shape = 'u32[]', space=smem, size = 0x4, offset = 0x4, fixed_abs, tag = 'smem constant byte address 0x4 - core index']
  #allocation1 [shape = 'u32[144,128]{1,0:T(1,128)}', space=vmem, size = 0x12000, scoped, tag = 'internal scratch']
  %s0 = inlined_call_operand.vmem [shape: f32[20,16], index: 0, kind: input, shape index: {}]
  %s1 = inlined_call_operand.vmem [shape: s32[20,1], index: 1, kind: input, shape index: {}]
  %s2 = inlined_call_operand.hbm [shape: f32[1,8,128], index: 2, kind: output, shape index: {}]
  %s3 = sld [smem:[#allocation0]]
  $region45: #{tpu_custom_call.1} parent=0
    _
  %s5 = ssub.s32 1, %s3
  %s6 = scalar_select 0, %s5, %s3
  $region1: #{tpu_custom_call.1} parent=0
    #allocation2 [shape = 'u8[4096]{0}', space=vmem, size = 0x1000, scoped, tag = 'output window, operand 0, single buffered']
    #allocation3 [shape = 's32[2]{0}', space=sflag, size = 0x8, scoped, tag = 'scoped memory for tpu_custom_call.1']
    %7 = vsyncpa [#allocation3], 0
    loop: start=0, step=1, limit=5
    $region2: #{tpu_custom_call.1} parent=1 // loop_pre_header
      _
    $region3: #{tpu_custom_call.1} parent=1 // loop_header
      %s9 = sphi 0, %s13
      %p10 = scmp.ge.s32.totalorder %s9, 5
      %s16 = sphi 0, %s28
      %s17 = sphi 0, %s24
      %s18 = sphi 0, %s16
      %s19 = sphi 0, %s17
      %s20 = sphi 0, %s18
      %s21 = sphi 0, %s19
      %s39 = sphi 0, %s41
      %s42 = sphi 0, %s39
      %s43 = sphi 0, %s42
      %s59 = sphi 0, %s43
      %s73 = sphi 0, %s75
      %s76 = sphi 0, %s73
      %s77 = sphi 0, %s76
      %s93 = sphi 0, %s77
      %s99 = sphi 0, %s101
      %s102 = sphi 0, %s99
      %s103 = sphi 0, %s102
      %s119 = sphi 0, %s103
    $region4: #{tpu_custom_call.1} parent=1 // loop_header_branch
      %12 = sbr.rel (%p10) target = $region8
    $region5: #{tpu_custom_call.1} parent=1 // loop_body
      %s14 = ssub.s32 %s9, 1
      %s15 = ssub.s32 %s9, 2
      %s22 = sadd.s32 1, %s17
      %p23 = scmp.ge.s32.totalorder %s22, 3
      %s24 = scalar_select %p23, 0, %s22
      %s25 = sadd.s32 1, %s16
      %s26 = scalar_select %p23, %s25, %s16
      %p27 = scmp.ge.s32.totalorder %s26, 1
      %s28 = scalar_select %p27, 0, %s26
      %s29 = smul.u32 %s16, 3
      %s30 = sadd.s32 %s29, %s17
      %p31 = scmp.lt.s32.totalorder %s30, 2
      %s32 = scalar_select %p31, %s30, 2
      %s33 = smul.u32 %s28, 3
      %s34 = sadd.s32 %s33, %s24
      %p35 = scmp.lt.s32.totalorder %s34, 2
      %s36 = scalar_select %p35, %s34, 2
      %s37 = ssub.s32 %s32, %s36
      %p38 = scmp.eq.s32.totalorder %s37, 0
      %s40 = sadd.s32 %s39, 1
      %s41 = scalar_select %p38, %s39, %s40
      %p44 = pneg %p38
      %p45 = scmp.eq.s32.totalorder %s9, 2
      %p46 = por %p44, %p45
      %p47 = scmp.ne.s32.totalorder %s39, %s42
      %p48 = scmp.eq.s32.totalorder %s9, 0
      %p49 = por %p47, %p48
      %p50 = scmp.ne.s32.totalorder %s39, %s42
      %p51 = scmp.eq.s32.totalorder %s14, 2
      %p52 = por %p50, %p51
      %p53 = scmp.ne.s32.totalorder %s42, %s43
      %p54 = scmp.eq.s32.totalorder %s14, 0
      %p55 = por %p53, %p54
      %p56 = scmp.ne.s32.totalorder %s42, %s43
      %p57 = scmp.eq.s32.totalorder %s15, 2
      %p58 = por %p56, %p57
      %p60 = scmp.ne.s32.totalorder %s43, %s59
      %p61 = scmp.eq.s32.totalorder %s15, 0
      %p62 = por %p60, %p61
      %s63 = smul.u32 %s16, 3
      %s64 = sadd.s32 %s63, %s17
      %p65 = scmp.lt.s32.totalorder %s64, 2
      %s66 = scalar_select %p65, %s64, 2
      %s67 = smul.u32 %s28, 3
      %s68 = sadd.s32 %s67, %s24
      %p69 = scmp.lt.s32.totalorder %s68, 2
      %s70 = scalar_select %p69, %s68, 2
      %s71 = ssub.s32 %s66, %s70
      %p72 = scmp.eq.s32.totalorder %s71, 0
      %s74 = sadd.s32 %s73, 1
      %s75 = scalar_select %p72, %s73, %s74
      %p78 = pneg %p72
      %p79 = scmp.eq.s32.totalorder %s9, 2
      %p80 = por %p78, %p79
      %p81 = scmp.ne.s32.totalorder %s73, %s76
      %p82 = scmp.eq.s32.totalorder %s9, 0
      %p83 = por %p81, %p82
      %p84 = scmp.ne.s32.totalorder %s73, %s76
      %p85 = scmp.eq.s32.totalorder %s14, 2
      %p86 = por %p84, %p85
      %p87 = scmp.ne.s32.totalorder %s76, %s77
      %p88 = scmp.eq.s32.totalorder %s14, 0
      %p89 = por %p87, %p88
      %p90 = scmp.ne.s32.totalorder %s76, %s77
      %p91 = scmp.eq.s32.totalorder %s15, 2
      %p92 = por %p90, %p91
      %p94 = scmp.ne.s32.totalorder %s77, %s93
      %p95 = scmp.eq.s32.totalorder %s15, 0
      %p96 = por %p94, %p95
      %s97 = ssub.s32 %s16, %s28
      %p98 = scmp.eq.s32.totalorder %s97, 0
      %s100 = sadd.s32 %s99, 1
      %s101 = scalar_select %p98, %s99, %s100
      %p104 = pneg %p98
      %p105 = scmp.eq.s32.totalorder %s9, 2
      %p106 = por %p104, %p105
      %p107 = scmp.ne.s32.totalorder %s99, %s102
      %p108 = scmp.eq.s32.totalorder %s9, 0
      %p109 = por %p107, %p108
      %p110 = scmp.ne.s32.totalorder %s99, %s102
      %p111 = scmp.eq.s32.totalorder %s14, 2
      %p112 = por %p110, %p111
      %p113 = scmp.ne.s32.totalorder %s102, %s103
      %p114 = scmp.eq.s32.totalorder %s14, 0
      %p115 = por %p113, %p114
      %p116 = scmp.ne.s32.totalorder %s102, %s103
      %p117 = scmp.eq.s32.totalorder %s15, 2
      %p118 = por %p116, %p117
      %p120 = scmp.ne.s32.totalorder %s103, %s119
      %p121 = scmp.eq.s32.totalorder %s15, 0
      %p122 = por %p120, %p121
      %p123 = scmp.le.s32.totalorder 1, %s9
      %p124 = scmp.lt.s32.totalorder %s9, 4
      %p125 = pnand %p123, %p124
      %p126 = pneg %p125
      // Predicated region
      $region9: #{tpu_custom_call.1} parent=5 // pred_check
        _
      $region10: #{tpu_custom_call.1} parent=5 // pred_check_branch
        %128 = sbr.rel (%p125) target = $region12
      $region11: #{tpu_custom_call.1} parent=5 // pred_region
        %s129 = ssub.s32 %s9, 1
      $region12: #{tpu_custom_call.1} parent=5 // pred_fallthru
        _
      %p130 = scmp.lt.s32.totalorder %s9, 3
      // Predicated region
      $region13: #{tpu_custom_call.1} parent=5 // pred_check
        %p131 = pneg %p130
      $region14: #{tpu_custom_call.1} parent=5 // pred_check_branch
        %133 = sbr.rel (%p131) target = $region16
      $region15: #{tpu_custom_call.1} parent=5 // pred_region
        // Predicated region
        $region17: #{tpu_custom_call.1} parent=15 // pred_check
          %p134 = pneg %p49
        $region18: #{tpu_custom_call.1} parent=15 // pred_check_branch
          %136 = sbr.rel (%p134) target = $region20
        $region19: #{tpu_custom_call.1} parent=15 // pred_region
          %s137 = smul.u32 %s16, 3
          %s138 = sadd.s32 %s137, %s17
          %p139 = scmp.lt.s32.totalorder %s138, 2
          %s140 = scalar_select %p139, %s138, 2
          %p141 = scmp.lt.s32.totalorder %s140, 2
          %s142 = scalar_select %p141, %s140, 2
          %s143 = smul.addr %s142, 8
          %s144 = scalar_lea.vmem %s0, %s143
          %s145 = smul.u32 %s16, 3
          %s146 = sadd.s32 %s145, %s17
          %p147 = scmp.lt.s32.totalorder %s146, 2
          %s148 = scalar_select %p147, %s146, 2
        $region20: #{tpu_custom_call.1} parent=15 // pred_fallthru
          _
        // Predicated region
        $region21: #{tpu_custom_call.1} parent=15 // pred_check
          %p149 = pneg %p83
        $region22: #{tpu_custom_call.1} parent=15 // pred_check_branch
          %151 = sbr.rel (%p149) target = $region24
        $region23: #{tpu_custom_call.1} parent=15 // pred_region
          %s152 = smul.u32 %s16, 3
          %s153 = sadd.s32 %s152, %s17
          %p154 = scmp.lt.s32.totalorder %s153, 2
          %s155 = scalar_select %p154, %s153, 2
          %p156 = scmp.lt.s32.totalorder %s155, 2
          %s157 = scalar_select %p156, %s155, 2
          %s158 = smul.addr %s157, 8
          %s159 = scalar_lea.vmem %s1, %s158
          %s160 = smul.u32 %s16, 3
          %s161 = sadd.s32 %s160, %s17
          %p162 = scmp.lt.s32.totalorder %s161, 2
          %s163 = scalar_select %p162, %s161, 2
        $region24: #{tpu_custom_call.1} parent=15 // pred_fallthru
          _
      $region16: #{tpu_custom_call.1} parent=5 // pred_fallthru
        _
      %p164 = scmp.le.s32.totalorder 1, %s9
      %p165 = scmp.lt.s32.totalorder %s9, 4
      %p166 = pnand %p164, %p165
      %p167 = pneg %p166
      // Predicated region
      $region25: #{tpu_custom_call.1} parent=5 // pred_check
        _
      $region26: #{tpu_custom_call.1} parent=5 // pred_check_branch
        %169 = sbr.rel (%p166) target = $region28
      $region27: #{tpu_custom_call.1} parent=5 // pred_region
        %s170 = ssub.s32 %s9, 1
        %s171 = smul.u32 %s18, 3
        %s172 = sadd.s32 %s171, %s19
        %p173 = scmp.lt.s32.totalorder %s172, 2
        %s174 = scalar_select %p173, %s172, 2
        %p175 = scmp.lt.s32.totalorder %s174, 2
        %s176 = scalar_select %p175, %s174, 2
        %s177 = smul.addr %s176, 8
        %s178 = scalar_lea.vmem %s0, %s177
        %p179 = pneg %p55
        %p180 = pneg %p52
        %s181 = smul.u32 %s18, 3
        %s182 = sadd.s32 %s181, %s19
        %p183 = scmp.lt.s32.totalorder %s182, 2
        %s184 = scalar_select %p183, %s182, 2
        %p185 = scmp.lt.s32.totalorder %s184, 2
        %s186 = scalar_select %p185, %s184, 2
        %s187 = smul.addr %s186, 8
        %s188 = scalar_lea.vmem %s1, %s187
        %p189 = pneg %p89
        %p190 = pneg %p86
        %p191 = pneg %p115
        %p192 = pneg %p112
        %s193 = smul.u32 %s18, 3
        %s194 = sadd.s32 %s193, %s19
        %p195 = scmp.lt.s32.totalorder %s194, 2
        %s196 = scalar_select %p195, %s194, 2
        %p197 = scmp.lt.s32.totalorder %s196, 2
        %s198 = scalar_select %p197, %s196, 2
        %s199 = smul.addr %s198, 8
        %s200 = scalar_lea.vmem %s0, %s199
        %s201 = smul.u32 %s18, 3
        %s202 = sadd.s32 %s201, %s19
        %p203 = scmp.lt.s32.totalorder %s202, 2
        %s204 = scalar_select %p203, %s202, 2
        %s205 = smul.u32 %s18, 3
        %s206 = sadd.s32 %s205, %s19
        %p207 = scmp.lt.s32.totalorder %s206, 2
        %s208 = scalar_select %p207, %s206, 2
        %p209 = scmp.lt.s32.totalorder %s208, 2
        %s210 = scalar_select %p209, %s208, 2
        %s211 = smul.addr %s210, 8
        %s212 = scalar_lea.vmem %s1, %s211
        %s213 = smul.u32 %s18, 3
        %s214 = sadd.s32 %s213, %s19
        %p215 = scmp.lt.s32.totalorder %s214, 2
        %s216 = scalar_select %p215, %s214, 2
        %p217 = scmp.eq.s32.totalorder %s19, 0
        // Predicated region
        $region29: #{tpu_custom_call.1} parent=27 // pred_check
          %p218 = pneg %p217
        $region30: #{tpu_custom_call.1} parent=27 // pred_check_branch
          %220 = sbr.rel (%p218) target = $region32
        $region31: #{tpu_custom_call.1} parent=27 // pred_region
          %221 = vst [vmem:[#allocation2] sm:$0xff] 0.0
        $region32: #{tpu_custom_call.1} parent=27 // pred_fallthru
          _
        %v222 = vld [vmem:[%s200] sm:$0xff]
        %v223 = vld [vmem:[%s212] sm:$0xff]
        %s224 = smul.u32 %s18, 3
        %s225 = sadd.s32 %s224, %s19
        %s226 = smul.u32 %s225, 8
        %v227 = vlaneseq
        %v228 = vshrl.u32 %v227, 7
        %v229 = vstv %s226
        %v230 = vadd.s32 %v228, %v229
        %vm231 = vcmp.lt.s32.totalorder %v230, 20
        %v232 = vsel %vm231, 1, 0
        %vm233 = vcmp.eq.s32.totalorder %v232, 1
        %v234 = vsel %vm233, %v222, 0.0
        %v235 = vsel %vm231, %v223, 0
        %vm236 = vcmask 130048
        %v237 = vsel %vm236, %v234, -inf
        %238 = vmax.xlane.f32.xlu0 %v237
        %v239 = vpop.xlane.xlu0 %238
        %v240 = vsub.f32 %v234, %v239
        %v241 = vmul.f32 %v240, 1.442695
        %v242 = vpow.pop %v241
        %v243 = vsel %vm236, %v242, 0.0
        %244 = vadd.xlane.f32.xlu0 %v243
        %v245 = vpop.xlane.xlu0 %244
        %v246 = vlaneseq
        %v247 = vand.u32 %v246, 127
        %248 = vset.pattern.permute.xlu0 0
        %249 = vperm.xlu0 %248, %v235
        %v250 = vpop.permute.xlu0 %249
        %vm251 = vcmp.eq.s32.totalorder %v247, %v250
        %v252 = vsel %vm251, %v242, 0.0
        %v253 = vsel %vm236, %v252, 0.0
        %254 = vadd.xlane.f32.xlu0 %v253
        %v255 = vpop.xlane.xlu0 %254
        %v256 = vrcp.pop %v245
        %v257 = vmul.f32 %v255, %v256
        %vm258 = vcmp.gt.s32.totalorder %v235, 2
        %v259 = vsel %vm258, 1.0, 0.0
        %v260 = vlog2.pop %v257
        %v261 = vmul.f32 %v260, 0.6931472
        %v262 = vmul.f32 %v261, 1.442695
        %v263 = vsub.f32 1.0, %v257
        %v264 = vmul.f32 %v263, %v263
        %v265 = vsub.f32 0.0, %v264
        %v266 = vmul.f32 %v265, %v262
        %v267 = vmul.f32 %v259, 2.0
        %v268 = vmul.f32 %v267, %v262
        %v269 = vsub.f32 %v266, %v268
        %v270 = vsel %vm231, %v269, 0.0
        %v271 = vld [vmem:[#allocation2] sm:$0xff]
        %vm272 = vcmask 7168
        %v273 = vsel %vm272, %v270, 0.0
        %274 = vadd.xlane.f32.xlu0 %v273
        %v275 = vpop.xlane.xlu0 %274
        %v276 = vrot.slane %v275, 4
        %v277 = vadd.f32 %v275, %v276
        %v278 = vrot.slane %v277, 2
        %v279 = vadd.f32 %v277, %v278
        %v280 = vrot.slane %v279, 1
        %v281 = vadd.f32 %v279, %v280
        %s282 = vtos %v281
        %v283 = vstv %s282
        %v284 = vadd.f32 %v271, %v283
        %285 = vst [vmem:[#allocation2] sm:$0xff] %v284
        // Predicated region
        $region33: #{tpu_custom_call.1} parent=27 // pred_check
          %p286 = pneg %p112
        $region34: #{tpu_custom_call.1} parent=27 // pred_check_branch
          %288 = sbr.rel (%p286) target = $region36
        $region35: #{tpu_custom_call.1} parent=27 // pred_region
          %s290 = ssub.s32 128, 128
          %291 = vsyncadd [#allocation3], %s290
          %s292 = smul.addr %s18, 128
          %s293 = scalar_lea.hbm %s2, %s292
          %s295 = sshll.u32 [#allocation2], 4
          %s296 = int_to_ptr.vmem [resolvable:$true] %s295
          %298 = dma.vmem_to_hbm [thread:$0]  %s296, 128, %s293, [#allocation3]
        $region36: #{tpu_custom_call.1} parent=27 // pred_fallthru
          _
        // Predicated region
        $region37: #{tpu_custom_call.1} parent=27 // pred_check
          %p299 = pneg %p112
        $region38: #{tpu_custom_call.1} parent=27 // pred_check_branch
          %301 = sbr.rel (%p299) target = $region40
        $region39: #{tpu_custom_call.1} parent=27 // pred_region
          %302 = dma.done [#allocation3], 128
        $region40: #{tpu_custom_call.1} parent=27 // pred_fallthru
          _
      $region28: #{tpu_custom_call.1} parent=5 // pred_fallthru
        _
      %p303 = scmp.le.s32.totalorder 2, %s9
      // Predicated region
      $region41: #{tpu_custom_call.1} parent=5 // pred_check
        %p304 = pneg %p303
      $region42: #{tpu_custom_call.1} parent=5 // pred_check_branch
        %306 = sbr.rel (%p304) target = $region44
      $region43: #{tpu_custom_call.1} parent=5 // pred_region
        %s307 = ssub.s32 %s9, 2
      $region44: #{tpu_custom_call.1} parent=5 // pred_fallthru
        _
    $region6: #{tpu_custom_call.1} parent=1 // loop_footer
      %s13 = sadd.s32 1, %s9
    $region7: #{tpu_custom_call.1} parent=1 // loop_footer_branch
      %8 = sbr.rel target = $region3
    $region8: #{tpu_custom_call.1} parent=1 // loop_exit
      _
    %308 = vsyncpa [#allocation3], 1
    %s309 = scalar_lea.sflag [#allocation3], 1
    %310 = vsyncpa %s309, 1

</llo_original>
